<compile_context>
chip_gen: v7x
topology: tpu7x:2x2x1
jax: 0.10.0
libtpu: 0.0.40
codegen_flags: <defaults>
</compile_context>

<pallas_src>
import functools
from dataclasses import dataclass

import jax
import jax.numpy as jnp
from jax import lax
from jax.experimental import pallas as pl
from jax.experimental.pallas import tpu as pltpu


def _round_up(x, m):
    return ((x + m - 1) // m) * m


# -----------------------------------------------------------------------------
# Hardware-aware planning
# -----------------------------------------------------------------------------
_CONSERVATIVE_SCOPED_VMEM = 16 << 20      # v5e default scoped limit (v6e/v7x: 32 MiB)


def _physical_vmem_bytes():
    try:
        return int(pltpu.get_tpu_info().vmem_capacity_bytes)
    except Exception:
        return 64 << 20                   # v7x worst case


def _default_vmem_budget():
    # Leave ~1/4 of physical VMEM for compiler scratch / double-buffered blocks
    # (~48 MiB on v7x, ~96 MiB on v5e/v6e).
    return (_physical_vmem_bytes() * 3) // 4


def _row_tile_cap():
    try:
        kind = jax.devices()[0].device_kind.lower()
    except Exception:
        return 128
    # v6e/v7x MXUs are 2x256^2; v5e (and older) MXUs are 128-wide.
    return 256 if ("v6" in kind or "v7" in kind or "7x" in kind) else 128


def _select_row_tile(M, cap):
    """Pick (tile_m, M_pad) with tile_m | M_pad and tile_m % 16 == 0 (bf16
    sublane packing => aligned in-kernel row slices), balancing row-padding
    waste against skinny-tile MXU underutilization and preferring >= 2 row
    tiles so both TensorCores get work on dual-TC chips (v7x)."""
    M8 = _round_up(M, 8)
    if M8 <= 8:
        return 8, 8
    best_score, best = None, None
    for t in range(16, cap + 1, 16):
        m_pad = _round_up(M8, t)
        n_tiles = m_pad // t
        skinny = max(0, 64 - t) / 128.0
        single = 1 if n_tiles < 2 else 0
        score = (single, m_pad * (1.0 + skinny), -t)
        if best_score is None or score < best_score:
            best_score, best = score, (t, m_pad)
    return best


@dataclass(frozen=True)
class _Plan:
    M: int
    K: int
    M_pad: int
    K_pad: int
    tile_m: int
    tile_k: int
    nk: int
    n_rows: int
    vmem_est: int


def _vmem_estimate(*, M_pad, tile_m, tile_k, nk, with_target, with_gram):
    e = (1 if nk == 1 else 2) * M_pad * tile_k * 2      # bf16 feature panel(s)
    if with_target:
        e += 2 * tile_m * M_pad * 4                     # target slab (double buf)
        e += 2 * 8 * 128 * 4                            # partial-sum out block
    if with_gram:
        e += 2 * tile_m * M_pad * 4                     # gram output slab
    if nk > 1:
        e += tile_m * M_pad * 4                         # f32 accumulator scratch
    return e


def _plan(M, K, *, with_target, with_gram, budget=None):
    if budget is None:
        budget = _default_vmem_budget()
    tile_m, M_pad = _select_row_tile(M, _row_tile_cap())
    K_pad0 = _round_up(K, 128)
    est = functools.partial(_vmem_estimate, M_pad=M_pad, tile_m=tile_m,
                            with_target=with_target, with_gram=with_gram)
    if est(tile_k=K_pad0, nk=1) <= budget:
        tile_k, K_pad, nk = K_pad0, K_pad0, 1           # resident, single-buffered F
    else:
        # K-reduction axis: stream (M_pad, tile_k) column panels of F.
        fixed = est(tile_k=0, nk=2)
        avail = max(budget - fixed, 0)
        tile_k = max(128, (avail // (4 * M_pad)) // 128 * 128)
        K_pad = _round_up(K, tile_k)
        nk = K_pad // tile_k
        if nk == 1:                                     # degenerate: fall back
            tile_k = K_pad = K_pad0
    n_rows = M_pad // tile_m
    # TODO(synk): for very large M (row panel alone exceeding the budget), add a
    # column-tile grid axis (and exploit gram symmetry in the loss-only path).
    return _Plan(M, K, M_pad, K_pad, tile_m, tile_k, nk, n_rows,
                 est(tile_k=tile_k, nk=nk))


def _compiler_params(vmem_est):
    kwargs = dict(dimension_semantics=("parallel", "arbitrary"))
    if vmem_est > _CONSERVATIVE_SCOPED_VMEM:
        cap = _physical_vmem_bytes()
        limit = min(vmem_est + (4 << 20), cap - (8 << 20))
        kwargs["vmem_limit_bytes"] = int(max(limit, 32 << 20))
    return pltpu.CompilerParams(**kwargs)


# -----------------------------------------------------------------------------
# Kernels
# -----------------------------------------------------------------------------
def _gram_panel(feat_ref, tile_m):
    """(tile_m, M_pad) panel of F_slab @ F.T for the current (row, k) grid step."""
    i = pl.program_id(0)
    row0 = pl.multiple_of(i * tile_m, tile_m)
    slab = feat_ref[pl.ds(row0, tile_m), :]             # (tile_m, tile_k) bf16
    # Transposed-RHS contraction (dim 1 of both operands): no XLU transpose of F.
    # TODO(synk): confirm via pl.lower_as_mlir / bundle dump that no per-step
    # vxpose of the (M_pad, tile_k) panel is emitted; if one shows up,
    # pre-materialize F^T once in the wrapper and contract canonically.
    return lax.dot_general(slab, feat_ref[...],
                           dimension_numbers=(((1,), (1,)), ((), ())),
                           preferred_element_type=jnp.float32)


def _scalar_block(ps):
    """Lane-dense (8,128) block with `ps` at [0,0]: one unmasked vector store."""
    r = lax.broadcasted_iota(jnp.int32, (8, 128), 0)
    c = lax.broadcasted_iota(jnp.int32, (8, 128), 1)
    return jnp.where((r == 0) & (c == 0), ps, jnp.float32(0.0))


def _gram_kernel(feat_ref, gram_ref, *acc, tile_m, nk, inv_denom):
    panel = _gram_panel(feat_ref, tile_m)
    if nk == 1:
        gram_ref[...] = panel * inv_denom
    else:
        (acc_ref,) = acc
        k = pl.program_id(1)

        @pl.when(k == 0)
        def _():
            acc_ref[...] = jnp.zeros_like(acc_ref)

        acc_ref[...] += panel

        @pl.when(k == nk - 1)
        def _():
            gram_ref[...] = acc_ref[...] * inv_denom


def _loss_kernel(feat_ref, tgt_ref, part_ref, *acc, tile_m, nk, inv_denom):
    panel = _gram_panel(feat_ref, tile_m)

    def emit(gram_slab):
        diff = gram_slab - tgt_ref[...]                 # f32 diff / MSE math
        part_ref[...] = _scalar_block(jnp.sum(diff * diff))

    if nk == 1:
        emit(panel * inv_denom)
    else:
        (acc_ref,) = acc
        k = pl.program_id(1)

        @pl.when(k == 0)
        def _():
            acc_ref[...] = jnp.zeros_like(acc_ref)

        acc_ref[...] += panel

        @pl.when(k == nk - 1)
        def _():
            emit(acc_ref[...] * inv_denom)


# -----------------------------------------------------------------------------
# pallas_call wrappers
# -----------------------------------------------------------------------------
def _feat_spec(M_pad, tile_k, nk):
    if nk == 1:
        # Full F resident across the whole grid; single buffer (index never changes).
        return pl.BlockSpec((M_pad, tile_k), lambda i, k: (0, k),
                            pipeline_mode=pl.Buffered(1))
    return pl.BlockSpec((M_pad, tile_k), lambda i, k: (0, k))


def _feat_hbm_bytes(plan):
    once = plan.M_pad * plan.K_pad * 2
    return once if plan.nk == 1 else once * plan.n_rows


def _gram_call(feats_pad, plan, inv_denom):
    """feats_pad: (M_pad, K_pad) bf16, zero padded. Returns (M_pad, M_pad) f32 gram."""
    M_pad, K_pad = feats_pad.shape
    tm, tk, nk, nr = plan.tile_m, plan.tile_k, plan.nk, plan.n_rows
    kernel = functools.partial(_gram_kernel, tile_m=tm, nk=nk, inv_denom=inv_denom)
    scratch = () if nk == 1 else (pltpu.VMEM((tm, M_pad), jnp.float32),)
    return pl.pallas_call(
        kernel,
        out_shape=jax.ShapeDtypeStruct((M_pad, M_pad), jnp.float32),
        grid_spec=pltpu.PrefetchScalarGridSpec(
            num_scalar_prefetch=0,
            grid=(nr, nk),
            in_specs=[_feat_spec(M_pad, tk, nk)],
            out_specs=pl.BlockSpec((tm, M_pad), lambda i, k: (i, 0)),
            scratch_shapes=scratch),
        compiler_params=_compiler_params(plan.vmem_est),
        cost_estimate=pl.CostEstimate(
            flops=2 * M_pad * M_pad * K_pad,
            transcendentals=0,
            bytes_accessed=_feat_hbm_bytes(plan) + M_pad * M_pad * 4),
    )(feats_pad)


def _loss_call(feats_pad, target_pad, plan, inv_denom):
    """Returns (n_rows*8, 128) f32 per-row-tile partial sums of (G - target)^2.
    No gram writeback in the forward path (it is never needed)."""
    M_pad, K_pad = feats_pad.shape
    tm, tk, nk, nr = plan.tile_m, plan.tile_k, plan.nk, plan.n_rows
    kernel = functools.partial(_loss_kernel, tile_m=tm, nk=nk, inv_denom=inv_denom)
    scratch = () if nk == 1 else (pltpu.VMEM((tm, M_pad), jnp.float32),)
    # TODO(synk): exploit gram symmetry for large M with a 2D (row, col) output
    # tile grid computing only j >= i tiles (off-diagonal tiles weighted by 2).
    return pl.pallas_call(
        kernel,
        out_shape=jax.ShapeDtypeStruct((nr * 8, 128), jnp.float32),
        grid_spec=pltpu.PrefetchScalarGridSpec(
            num_scalar_prefetch=0,
            grid=(nr, nk),
            in_specs=[_feat_spec(M_pad, tk, nk),
                      pl.BlockSpec((tm, M_pad), lambda i, k: (i, 0))],
            out_specs=pl.BlockSpec((8, 128), lambda i, k: (i, 0)),
            scratch_shapes=scratch),
        compiler_params=_compiler_params(plan.vmem_est),
        cost_estimate=pl.CostEstimate(
            flops=2 * M_pad * M_pad * K_pad,
            transcendentals=0,
            bytes_accessed=_feat_hbm_bytes(plan) + M_pad * M_pad * 4
                           + nr * 8 * 128 * 4),
    )(feats_pad, target_pad)


# -----------------------------------------------------------------------------
# Module-level API (mirrors the PyTorch code)
# -----------------------------------------------------------------------------
def _flatten(x):
    b, h, w, f = x.shape
    return jnp.asarray(x).reshape(b * h, w * f), b * h, w * f


def _pad_features(feats, plan):
    M, K = feats.shape
    # bf16 MXU inputs (f32 accumulation): ~2-3x MXU throughput on v5e/v6e/v7x and
    # half the resident-F VMEM footprint; gram/diff math stays f32 in the kernel.
    feats = feats.astype(jnp.bfloat16)
    if (plan.M_pad, plan.K_pad) != (M, K):
        feats = jnp.pad(feats, ((0, plan.M_pad - M), (0, plan.K_pad - K)))
    return feats


def gram_matrix_pallas(x, *, vmem_budget_bytes=None):
    """Pallas equivalent of gram_matrix(); x: (b, h, w, f)."""
    feats, M, K = _flatten(x)
    plan = _plan(M, K, with_target=False, with_gram=True, budget=vmem_budget_bytes)
    g_pad = _gram_call(_pad_features(feats, plan), plan, 1.0 / float(M * K))
    return g_pad[:M, :M]


class StyleLoss:
    """JAX/Pallas port of the PyTorch StyleLoss module."""

    def __init__(self, target_feature, *, vmem_budget_bytes=None):
        self._shape = tuple(target_feature.shape)
        self._budget = vmem_budget_bytes
        feats, M, K = _flatten(target_feature)
        self._M, self._K = M, K
        self._inv_denom = 1.0 / float(M * K)
        # Gram-only kernel at build time: no dummy MSE path / zeros target.
        plan = _plan(M, K, with_target=False, with_gram=True, budget=self._budget)
        self._M_pad = plan.M_pad
        self._target_pad = _gram_call(_pad_features(feats, plan), plan,
                                      self._inv_denom)
        self.target = self._target_pad[:M, :M]
        self.loss = jnp.float32(0.0)        # F.mse_loss(target, target) == 0

    def __call__(self, x):
        assert tuple(x.shape) == self._shape, "input must match target_feature shape"
        feats, M, K = _flatten(x)
        plan = _plan(M, K, with_target=True, with_gram=False, budget=self._budget)
        assert plan.M_pad == self._M_pad
        partials = _loss_call(_pad_features(feats, plan), self._target_pad,
                              plan, self._inv_denom)
        self.loss = jnp.sum(partials) * (1.0 / float(M * M))
        return x                             # forward returns its input unchanged


# -----------------------------------------------------------------------------
# Pure-JAX reference + self-test
# -----------------------------------------------------------------------------
def _reference(x, target_feature):
    def gm(t):
        b, h, w, f = t.shape
        feats = t.reshape(b * h, w * f)
        g = jnp.dot(feats, feats.T, precision=lax.Precision.HIGHEST)
        return g / (b * h * w * f)
    tgt = gm(target_feature)
    g = gm(x)
    return tgt, jnp.mean((g - tgt) ** 2)


def _check(module, x, target_feature, name):
    out = jax.block_until_ready(module(x))
    loss = jax.block_until_ready(module.loss)
    tgt_ref, loss_ref = _reference(x, target_feature)
    assert out.shape == x.shape and bool(jnp.allclose(out, x)), name
    assert bool(jnp.allclose(module.target, tgt_ref, atol=3e-3, rtol=3e-2)), name
    assert bool(jnp.allclose(loss, loss_ref, rtol=5e-2, atol=1e-7)), name


if __name__ == "__main__":
    key = jax.random.PRNGKey(0)
    k1, k2, k3, k4, k5, k6 = jax.random.split(key, 6)

    # (batch, h, w, f_map_num) per the module's .size() unpacking.
    tf1 = jax.random.normal(k1, (2, 16, 16, 4), dtype=jnp.float32)
    x1 = jax.random.normal(k2, (2, 16, 16, 4), dtype=jnp.float32)
    _check(StyleLoss(tf1), x1, tf1, "case1")

    # Non-128-multiple row count: M=144 now stays at M_pad=144 (no pad to 256).
    tf2 = jax.random.normal(k3, (1, 144, 8, 16), dtype=jnp.float32)
    x2 = jax.random.normal(k4, (1, 144, 8, 16), dtype=jnp.float32)
    _check(StyleLoss(tf2), x2, tf2, "case2")

    # Force the K-reduction (streamed column panel + accumulator) path by giving
    # the planner a tiny VMEM budget, so that code path is exercised on-device.
    tf3 = jax.random.normal(k5, (1, 64, 8, 32), dtype=jnp.float32)
    x3 = jax.random.normal(k6, (1, 64, 8, 32), dtype=jnp.float32)
    forced_budget = 48 * 1024
    p3 = _plan(64, 256, with_target=True, with_gram=False, budget=forced_budget)
    assert p3.nk >= 2, "expected forced K-tiled plan"
    _check(StyleLoss(tf3, vmem_budget_bytes=forced_budget), x3, tf3, "case3")

    print("KERNEL_OK")
</pallas_src>

<mosaic_0001>
module attributes {stable_mosaic.version = 11 : i64} {
  func.func @_gram_kernel(%arg0: i32, %arg1: i32, %arg2: memref<32x128xbf16, #tpu.memory_space<vmem>>, %arg3: memref<16x32xf32, #tpu.memory_space<vmem>>) attributes {dimension_semantics = [#tpu.dimension_semantics<parallel>, #tpu.dimension_semantics<arbitrary>], iteration_bounds = array<i64: 2, 1>, scalar_prefetch = 0 : i64, scratch_operands = 0 : i64, tpu.core_type = #tpu.core_type<tc>, window_params = [{pipeline_mode = #tpu.pipeline_mode<synchronous>, transform_indices = @transform_0, window_bounds = array<i64: 32, 128>}, {transform_indices = @transform_1, window_bounds = array<i64: 16, 32>}]} {
    %c16_i32 = arith.constant 16 : i32
    %0 = arith.muli %arg0, %c16_i32 : i32
    %1 = tpu.assume_multiple %0, 16 : i32
    %2 = arith.index_cast %1 : i32 to index
    %c0 = arith.constant 0 : index
    %3 = vector.load %arg2[%2, %c0] : memref<32x128xbf16, #tpu.memory_space<vmem>>, vector<16x128xbf16>
    %c0_0 = arith.constant 0 : index
    %c0_1 = arith.constant 0 : index
    %4 = vector.load %arg2[%c0_0, %c0_1] : memref<32x128xbf16, #tpu.memory_space<vmem>>, vector<32x128xbf16>
    %cst = arith.constant dense<0.000000e+00> : vector<16x32xf32>
    %5 = tpu.matmul %3, %4, %cst {dimension_numbers = #tpu.dot_dimension_numbers<[1], [1], [0], [0], [0, 0, 1, 0], [], []>} : vector<16x128xbf16>, vector<32x128xbf16>, vector<16x32xf32> -> vector<16x32xf32>
    %cst_2 = arith.constant 4.8828125E-4 : f32
    %6 = vector.broadcast %cst_2 : f32 to vector<16x32xf32>
    %7 = arith.mulf %5, %6 : vector<16x32xf32>
    %c0_3 = arith.constant 0 : index
    %c0_4 = arith.constant 0 : index
    %8 = vector.load %arg3[%c0_3, %c0_4] : memref<16x32xf32, #tpu.memory_space<vmem>>, vector<16x32xf32>
    tpu.vector_store %arg3[%c0_3, %c0_4], %7 {strides = array<i32>} : memref<16x32xf32, #tpu.memory_space<vmem>>, vector<16x32xf32>,
    return
  }
  func.func @transform_0(%arg0: i32, %arg1: i32) -> (i32, i32) {
    %c0_i32 = arith.constant 0 : i32
    %c0_i32_0 = arith.constant 0 : i32
    return %c0_i32, %arg1 : i32, i32
  }
  func.func @transform_1(%arg0: i32, %arg1: i32) -> (i32, i32) {
    %c0_i32 = arith.constant 0 : i32
    %c0_i32_0 = arith.constant 0 : i32
    return %arg0, %c0_i32 : i32, i32
  }
}

</mosaic_0001>

<llo_original>
// kernel: tpu_custom_call.1
$region0: #{tpu_custom_call.1}
  #allocation0 [shape = 'u32[]', space=smem, size = 0x4, offset = 0x4, fixed_abs, tag = 'smem constant byte address 0x4 - core index']
  #allocation1 [shape = 'u32[144,128]{1,0:T(1,128)}', space=vmem, size = 0x12000, scoped, tag = 'internal scratch']
  %s0 = inlined_call_operand.hbm [shape: bf16[32,128], index: 0, kind: input, shape index: {}]
  %s1 = inlined_call_operand.hbm [shape: f32[32,32], index: 1, kind: output, shape index: {}]
  %s2 = sld [smem:[#allocation0]]
  $region41: #{tpu_custom_call.1} parent=0
    _
  %s4 = ssub.s32 1, %s2
  %s5 = scalar_select 0, %s4, %s2
  $region1: #{tpu_custom_call.1} parent=0
    #allocation2 [shape = 'u8[8192]{0}', space=vmem, size = 0x2000, scoped, tag = 'input window, operand 0, single buffered']
    #allocation3 [shape = 's32[2]{0}', space=sflag, size = 0x8, scoped, tag = 'scoped memory for tpu_custom_call.1']
    #allocation4 [shape = 's32[2]{0}', space=sflag, size = 0x8, scoped, tag = 'scoped memory for tpu_custom_call.1']
    #allocation5 [shape = 'u8[16384]{0}', space=vmem, size = 0x4000, scoped, tag = 'output window, operand 0']
    %6 = vsyncpa [#allocation3], 0
    %7 = vsyncpa [#allocation4], 0
    %s8 = scalar_lea.sflag [#allocation4], 1
    %9 = vsyncpa %s8, 0
    loop: start=0, step=1, limit=4
    $region2: #{tpu_custom_call.1} parent=1 // loop_pre_header
      _
    $region3: #{tpu_custom_call.1} parent=1 // loop_header
      %s11 = sphi 0, %s15
      %p12 = scmp.ge.s32.totalorder %s11, 4
      %s18 = sphi 0, %s30
      %s19 = sphi 0, %s26
      %s20 = sphi 0, %s18
      %s21 = sphi 0, %s19
      %s22 = sphi 0, %s20
      %s23 = sphi 0, %s21
      %s33 = sphi 0, %s35
      %s36 = sphi 0, %s33
      %s37 = sphi 0, %s36
      %s53 = sphi 0, %s37
      %s59 = sphi 0, %s61
      %s62 = sphi 0, %s59
      %s63 = sphi 0, %s62
      %s79 = sphi 0, %s63
    $region4: #{tpu_custom_call.1} parent=1 // loop_header_branch
      %14 = sbr.rel (%p12) target = $region8
    $region5: #{tpu_custom_call.1} parent=1 // loop_body
      %s16 = ssub.s32 %s11, 1
      %s17 = ssub.s32 %s11, 2
      %s24 = sadd.s32 1, %s19
      %p25 = scmp.ge.s32.totalorder %s24, 1
      %s26 = scalar_select %p25, 0, %s24
      %s27 = sadd.s32 1, %s18
      %s28 = scalar_select %p25, %s27, %s18
      %p29 = scmp.ge.s32.totalorder %s28, 2
      %s30 = scalar_select %p29, 0, %s28
      %s31 = ssub.s32 %s19, %s26
      %p32 = scmp.eq.s32.totalorder %s31, 0
      %s34 = sadd.s32 %s33, 1
      %s35 = scalar_select %p32, %s33, %s34
      %p38 = pneg %p32
      %p39 = scmp.eq.s32.totalorder %s11, 1
      %p40 = por %p38, %p39
      %p41 = scmp.ne.s32.totalorder %s33, %s36
      %p42 = scmp.eq.s32.totalorder %s11, 0
      %p43 = por %p41, %p42
      %p44 = scmp.ne.s32.totalorder %s33, %s36
      %p45 = scmp.eq.s32.totalorder %s16, 1
      %p46 = por %p44, %p45
      %p47 = scmp.ne.s32.totalorder %s36, %s37
      %p48 = scmp.eq.s32.totalorder %s16, 0
      %p49 = por %p47, %p48
      %p50 = scmp.ne.s32.totalorder %s36, %s37
      %p51 = scmp.eq.s32.totalorder %s17, 1
      %p52 = por %p50, %p51
      %p54 = scmp.ne.s32.totalorder %s37, %s53
      %p55 = scmp.eq.s32.totalorder %s17, 0
      %p56 = por %p54, %p55
      %s57 = ssub.s32 %s18, %s30
      %p58 = scmp.eq.s32.totalorder %s57, 0
      %s60 = sadd.s32 %s59, 1
      %s61 = scalar_select %p58, %s59, %s60
      %p64 = pneg %p58
      %p65 = scmp.eq.s32.totalorder %s11, 1
      %p66 = por %p64, %p65
      %p67 = scmp.ne.s32.totalorder %s59, %s62
      %p68 = scmp.eq.s32.totalorder %s11, 0
      %p69 = por %p67, %p68
      %p70 = scmp.ne.s32.totalorder %s59, %s62
      %p71 = scmp.eq.s32.totalorder %s16, 1
      %p72 = por %p70, %p71
      %p73 = scmp.ne.s32.totalorder %s62, %s63
      %p74 = scmp.eq.s32.totalorder %s16, 0
      %p75 = por %p73, %p74
      %p76 = scmp.ne.s32.totalorder %s62, %s63
      %p77 = scmp.eq.s32.totalorder %s17, 1
      %p78 = por %p76, %p77
      %p80 = scmp.ne.s32.totalorder %s63, %s79
      %p81 = scmp.eq.s32.totalorder %s17, 0
      %p82 = por %p80, %p81
      %p83 = scmp.le.s32.totalorder 1, %s11
      %p84 = scmp.lt.s32.totalorder %s11, 3
      %p85 = pnand %p83, %p84
      %p86 = pneg %p85
      // Predicated region
      $region9: #{tpu_custom_call.1} parent=5 // pred_check
        _
      $region10: #{tpu_custom_call.1} parent=5 // pred_check_branch
        %88 = sbr.rel (%p85) target = $region12
      $region11: #{tpu_custom_call.1} parent=5 // pred_region
        %s89 = ssub.s32 %s11, 1
        // Predicated region
        $region13: #{tpu_custom_call.1} parent=11 // pred_check
          %p90 = pneg %p49
        $region14: #{tpu_custom_call.1} parent=11 // pred_check_branch
          %92 = sbr.rel (%p90) target = $region16
        $region15: #{tpu_custom_call.1} parent=11 // pred_region
          %s94 = ssub.s32 256, 256
          %95 = vsyncadd [#allocation3], %s94
          %s96 = smul.addr %s21, 64
          %s97 = scalar_lea.hbm %s0, %s96
          %s98 = sshll.u32 [#allocation2], 4
          %s99 = int_to_ptr.vmem [resolvable:$true] %s98
          %104 = dma.hbm_to_vmem [thread:$0]  %s97, 256, %s99, [#allocation3], 64, 64, 4
        $region16: #{tpu_custom_call.1} parent=11 // pred_fallthru
          _
      $region12: #{tpu_custom_call.1} parent=5 // pred_fallthru
        _
      %p105 = scmp.lt.s32.totalorder %s11, 2
      // Predicated region
      $region17: #{tpu_custom_call.1} parent=5 // pred_check
        %p106 = pneg %p105
      $region18: #{tpu_custom_call.1} parent=5 // pred_check_branch
        %108 = sbr.rel (%p106) target = $region20
      $region19: #{tpu_custom_call.1} parent=5 // pred_region
        _
      $region20: #{tpu_custom_call.1} parent=5 // pred_fallthru
        _
      %p109 = scmp.le.s32.totalorder 1, %s11
      %p110 = scmp.lt.s32.totalorder %s11, 3
      %p111 = pnand %p109, %p110
      %p112 = pneg %p111
      // Predicated region
      $region21: #{tpu_custom_call.1} parent=5 // pred_check
        _
      $region22: #{tpu_custom_call.1} parent=5 // pred_check_branch
        %114 = sbr.rel (%p111) target = $region24
      $region23: #{tpu_custom_call.1} parent=5 // pred_region
        %s115 = ssub.s32 %s11, 1
        // Predicated region
        $region25: #{tpu_custom_call.1} parent=23 // pred_check
          %p116 = pneg %p49
        $region26: #{tpu_custom_call.1} parent=23 // pred_check_branch
          %118 = sbr.rel (%p116) target = $region28
        $region27: #{tpu_custom_call.1} parent=23 // pred_region
          %119 = dma.done [#allocation3], 256
        $region28: #{tpu_custom_call.1} parent=23 // pred_fallthru
          _
        %p120 = pneg %p49
        %p121 = pneg %p46
        %p122 = pneg %p75
        %p123 = pneg %p72
        %s124 = sand.u32 %s62, 1
        %s125 = scalar_lea.sflag [#allocation4], %s124
        %s126 = sand.u32 %s62, 1
        %s127 = smul.addr %s126, 16
        %s128 = scalar_lea.vmem [#allocation5], %s127
        %s129 = smul.u32 2, %s20
        %s131 = smul.u32 %s20, 16
        %s132 = sshra.s32 %s131, 3
        %s133 = sand.u32 %s131, 7
        %s134 = smul.addr %s132, 4
        %s135 = scalar_lea.vmem [#allocation2], %s134
        %v136 = vld [vmem:[%s135] sm:$0xf]
        %v137 = vld [vmem:[%s135 + $0x4] sm:$0xf]
        %v138 = vld [vmem:[#allocation2] sm:$0xf]
        %v139 = vld [vmem:[#allocation2 + $0x4] sm:$0xf]
        %v140 = vld [vmem:[#allocation2 + $0x8] sm:$0xf]
        %v141 = vld [vmem:[#allocation2 + $0xc] sm:$0xf]
        %v144 = vunpack.c.l.b16 %v136
        %v145 = vunpack.c.l.b16 %v137
        %v146 = vpack.c.b16 %v145, %v144
        %v152 = vunpack.c.l.b16 %v138
        %v153 = vunpack.c.l.b16 %v139
        %v154 = vunpack.c.l.b16 %v140
        %v155 = vunpack.c.l.b16 %v141
        %v156 = vpack.c.b16 %v153, %v152
        %v157 = vpack.c.b16 %v155, %v154
        %160 = vmatprep.subr.bf16.mxu0 0
        %161 = vmatpush1.bf16.xpose.msra.mxu0 %v156
        %162 = vmatprep.subr.bf16.mxu0 0
        %163 = vmatpush1.bf16.xpose.msra.mxu0 %v157
        %164 = vmatprep.subr.bf16.mxu0 0
        %165 = vmatpush1.bf16.xpose.msra.mxu0 0
        %166 = vmatprep.subr.bf16.mxu0 0
        %167 = vmatpush1.bf16.xpose.msra.mxu0 0
        %168 = vmatprep.subr.bf16.mxu0 0
        %169 = vmatpush1.bf16.xpose.msra.mxu0 0
        %170 = vmatprep.subr.bf16.mxu0 0
        %171 = vmatpush1.bf16.xpose.msra.mxu0 0
        %172 = vmatprep.subr.bf16.mxu0 0
        %173 = vmatpush1.bf16.xpose.msra.mxu0 0
        %174 = vmatprep.subr.bf16.mxu0 0
        %175 = vmatpush1.bf16.xpose.msra.mxu0 0
        %176 = vmatprep.subr.bf16.mxu0 0
        %177 = vmatpush1.bf16.xpose.msra.mxu0 0
        %178 = vmatprep.subr.bf16.mxu0 0
        %179 = vmatpush1.bf16.xpose.msra.mxu0 0
        %180 = vmatprep.subr.bf16.mxu0 0
        %181 = vmatpush1.bf16.xpose.msra.mxu0 0
        %182 = vmatprep.subr.bf16.mxu0 0
        %183 = vmatpush1.bf16.xpose.msra.mxu0 0
        %184 = vmatprep.subr.bf16.mxu0 0
        %185 = vmatpush1.bf16.xpose.msra.mxu0 0
        %186 = vmatprep.subr.bf16.mxu0 0
        %187 = vmatpush1.bf16.xpose.msra.mxu0 0
        %188 = vmatprep.subr.bf16.mxu0 0
        %189 = vmatpush1.bf16.xpose.msra.mxu0 0
        %190 = vmatprep.subr.bf16.mxu0 0
        %191 = vmatpush1.bf16.xpose.msra.mxu0 0
        %192 = vmatprep.mubr.bf16.mxu0 0
        %193 = vmatmul.mubr.bf16.gmra.mrb[0].mxu0 %v146
        %v194 = vpop.f32.mrb[0].mxu0
        %v195 = vadd.f32 0.0, %v194
        %v196 = vpop.f32.mrb[0].mxu0
        %v197 = vpop.f32.mrb[0].mxu0
        %v198 = vadd.f32 0.0, %v197
        %v199 = vpop.f32.mrb[0].mxu0
        %200 = vdwg.mxu0
        %v201 = vmul.f32 %v195, 0.00048828125
        %v202 = vmul.f32 %v198, 0.00048828125
        %vm203 = vcmask 261120
        %204 = vst.msk [vmem:[%s128] sm:$0xff] %vm203, %v201
        %205 = vst.msk [vmem:[%s128 + $0x8] sm:$0xff] %vm203, %v202
        %s206 = sand.u32 %s62, 1
        %s207 = scalar_lea.sflag [#allocation4], %s206
        %s208 = sand.u32 %s62, 1
        %s209 = smul.addr %s208, 16
        %s210 = scalar_lea.vmem [#allocation5], %s209
        // Predicated region
        $region29: #{tpu_custom_call.1} parent=23 // pred_check
          %p211 = pneg %p72
        $region30: #{tpu_custom_call.1} parent=23 // pred_check_branch
          %213 = sbr.rel (%p211) target = $region32
        $region31: #{tpu_custom_call.1} parent=23 // pred_region
          %s214 = smul.u32 2, %s20
          %s216 = ssub.s32 256, 256
          %217 = vsyncadd %s207, %s216
          %s218 = smul.addr %s214, 128
          %s219 = scalar_lea.hbm %s1, %s218
          %s220 = sshll.u32 %s210, 4
          %s221 = int_to_ptr.vmem [resolvable:$true] %s220
          %226 = dma.vmem_to_hbm [thread:$0]  %s221, 256, %s219, %s207, 128, 128, 8
        $region32: #{tpu_custom_call.1} parent=23 // pred_fallthru
          _
      $region24: #{tpu_custom_call.1} parent=5 // pred_fallthru
        _
      %p227 = scmp.le.s32.totalorder 2, %s11
      // Predicated region
      $region33: #{tpu_custom_call.1} parent=5 // pred_check
        %p228 = pneg %p227
      $region34: #{tpu_custom_call.1} parent=5 // pred_check_branch
        %230 = sbr.rel (%p228) target = $region36
      $region35: #{tpu_custom_call.1} parent=5 // pred_region
        %s231 = ssub.s32 %s11, 2
        // Predicated region
        $region37: #{tpu_custom_call.1} parent=35 // pred_check
          %p232 = pneg %p78
        $region38: #{tpu_custom_call.1} parent=35 // pred_check_branch
          %234 = sbr.rel (%p232) target = $region40
        $region39: #{tpu_custom_call.1} parent=35 // pred_region
          %s235 = sand.u32 %s63, 1
          %s236 = scalar_lea.sflag [#allocation4], %s235
          %s237 = sand.u32 %s63, 1
          %s238 = smul.addr %s237, 16
          %s239 = scalar_lea.vmem [#allocation5], %s238
          %240 = dma.done %s236, 256
        $region40: #{tpu_custom_call.1} parent=35 // pred_fallthru
          _
      $region36: #{tpu_custom_call.1} parent=5 // pred_fallthru
        _
    $region6: #{tpu_custom_call.1} parent=1 // loop_footer
      %s15 = sadd.s32 1, %s11
    $region7: #{tpu_custom_call.1} parent=1 // loop_footer_branch
      %10 = sbr.rel target = $region3
    $region8: #{tpu_custom_call.1} parent=1 // loop_exit
      _
    %241 = vsyncpa [#allocation3], 1
    %s242 = scalar_lea.sflag [#allocation3], 1
    %243 = vsyncpa %s242, 1
    %244 = vsyncpa [#allocation4], 1
    %s245 = scalar_lea.sflag [#allocation4], 1
    %246 = vsyncpa %s245, 1

</llo_original>
